<compile_context>
chip_gen: v5e
topology: v5e:2x2
jax: 0.10.0
libtpu: 0.0.40
codegen_flags: <defaults>
</compile_context>

<pallas_src>
import jax
import jax.numpy as jnp
import numpy as np
from jax.experimental import pallas as pl
from jax.experimental.pallas import tpu as pltpu  # noqa: F401  (TPU backend)


# ----------------------------------------------------------------------------
# Forward pass (faithful to FullModel.forward — no tensor compute, empty dict)
# ----------------------------------------------------------------------------
def full_model_forward(systems_positions, outputs=None, selected_atoms=None):
    """JAX equivalent of FullModel.forward.

    first(...), second(...) and other(...) all return {}, so the merged
    result is always the empty dict.  No Pallas kernel is launched here —
    launching one would only add overhead for a semantic no-op.
    """
    result = {}          # first(...)  -> {}
    result.update({})    # second(...) -> {}
    result.update({})    # other(...)  -> {}
    return result


def requested_neighbor_lists():
    # (cutoff, full_list, strict, requestor) mirrors the NeighborListOptions
    # requested by the first / second / other submodules.
    return [
        (1.0, False, True, "first module"),
        (1.0, False, True, "second module"),
        (2.0, True, False, "other module"),
    ]


# ----------------------------------------------------------------------------
# Optional Pallas smoke-test kernel (NOT part of the forward semantics):
# a lane-dense, aliased identity pass over the System positions.
# ----------------------------------------------------------------------------
_LANES = 128
_SUBLANES = 8


def _identity_kernel(slab_ref, out_ref):
    # Pure pass-through; exists only to exercise the Pallas compile/run path.
    out_ref[...] = slab_ref[...]


def _to_lane_dense(positions):
    """Flatten [n_atoms, 3] positions into an (8k, 128) lane-dense slab."""
    flat = jnp.ravel(positions)
    n = flat.shape[0]
    block = _SUBLANES * _LANES
    padded = ((n + block - 1) // block) * block
    flat = jnp.pad(flat, (0, padded - n))
    return flat.reshape(padded // _LANES, _LANES)


def _identity_pallas(slab):
    # Single un-gridded block; block == full array and is (8,128)-aligned.
    # Output aliases operand 0 (P8); with donate_argnums the alias is real.
    return pl.pallas_call(
        _identity_kernel,
        out_shape=jax.ShapeDtypeStruct(slab.shape, slab.dtype),
        input_output_aliases={0: 0},
    )(slab)


# jit + donation makes input_output_aliases effective (no defensive copy) and
# amortizes dispatch overhead.
_identity_pallas_jit = jax.jit(_identity_pallas, donate_argnums=0)


# ----------------------------------------------------------------------------
# Smoke test
# ----------------------------------------------------------------------------
if __name__ == "__main__":
    key = jax.random.PRNGKey(0)
    n_atoms = 16
    positions = jax.random.normal(key, (n_atoms, 3), dtype=jnp.float32)

    # ---- forward semantics: empty dict, exactly like the PyTorch module ----
    result = full_model_forward(positions, outputs={}, selected_atoms=None)
    assert result == {}

    # ---- Pallas smoke test (identity over a lane-dense slab) ---------------
    slab = _to_lane_dense(positions)
    # Host copies taken BEFORE the call: the slab is donated and must not be
    # read afterwards.
    expected_slab = np.asarray(slab)
    expected_positions = np.asarray(positions)

    out_slab = _identity_pallas_jit(slab)
    out_slab = jax.block_until_ready(out_slab)

    out_np = np.asarray(out_slab)
    assert out_np.shape == expected_slab.shape
    assert out_np.dtype == expected_slab.dtype
    assert np.allclose(out_np, expected_slab)
    # Recover the original positions from the lane-dense slab.
    recovered = out_np.ravel()[: n_atoms * 3].reshape(n_atoms, 3)
    assert np.allclose(recovered, expected_positions)

    # TODO(synk): System / ModelOutput / Labels / TensorMap are pure metadata
    # containers with no array compute; they have no Pallas equivalent and are
    # represented here only by the positions array used in the smoke test.
    print("KERNEL_OK")
</pallas_src>

<mosaic_0001>
module attributes {stable_mosaic.version = 11 : i64} {
  func.func @_identity_kernel(%arg0: memref<8x128xf32, #tpu.memory_space<vmem>>, %arg1: memref<8x128xf32, #tpu.memory_space<vmem>>) attributes {dimension_semantics = [], scalar_prefetch = 0 : i64, scratch_operands = 0 : i64, tpu.core_type = #tpu.core_type<tc>} {
    %c0 = arith.constant 0 : index
    %c0_0 = arith.constant 0 : index
    %0 = vector.load %arg0[%c0, %c0_0] : memref<8x128xf32, #tpu.memory_space<vmem>>, vector<8x128xf32>
    %c0_1 = arith.constant 0 : index
    %c0_2 = arith.constant 0 : index
    %1 = vector.load %arg1[%c0_1, %c0_2] : memref<8x128xf32, #tpu.memory_space<vmem>>, vector<8x128xf32>
    tpu.vector_store %arg1[%c0_1, %c0_2], %0 {strides = array<i32>} : memref<8x128xf32, #tpu.memory_space<vmem>>, vector<8x128xf32>,
    return
  }
}

</mosaic_0001>

<llo_original>
// kernel: _identity_pallas.1
$region0: #{_identity_pallas.1}
  #allocation0 [shape = 'u32[]', space=smem, size = 0x4, offset = 0x4, fixed_abs, tag = 'smem constant byte address 0x4 - core index']
  #allocation1 [shape = 'u32[72,128]{1,0:T(1,128)}', space=vmem, size = 0x9000, scoped, tag = 'internal scratch']
  %s0 = inlined_call_operand.hbm [shape: f32[8,128], index: 0, kind: input, shape index: {}, may-alias: {0,1}]
  %s1 = inlined_call_operand.hbm [shape: f32[8,128], index: 1, kind: output, shape index: {}, may-alias: {0,1}]
  %s2 = sld [smem:[#allocation0]]
  $region18: #{_identity_pallas.1} parent=0
    _
  %s4 = ssub.s32 1, %s2
  %s5 = scalar_select 0, %s4, %s2
  $region1: #{_identity_pallas.1} parent=0
    #allocation2 [shape = 'u8[4096]{0}', space=vmem, size = 0x1000, scoped, tag = 'input window, operand 0, single buffered']
    #allocation3 [shape = 's32[1]{0}', space=sflag, size = 0x4, scoped, tag = 'scoped memory for _identity_pallas.1']
    #allocation4 [shape = 's32[1]{0}', space=sflag, size = 0x4, scoped, tag = 'scoped memory for _identity_pallas.1']
    #allocation5 [shape = 'u8[4096]{0}', space=vmem, size = 0x1000, scoped, tag = 'output window, operand 0, single buffered']
    %6 = vsyncpa [#allocation3], 0
    %7 = vsyncpa [#allocation4], 0
    // Predicated region
    $region2: #{_identity_pallas.1} parent=1 // pred_check
      _
    $region3: #{_identity_pallas.1} parent=1 // pred_check_branch
      %9 = sbr.rel (0) target = $region5
    $region4: #{_identity_pallas.1} parent=1 // pred_region
      %11 = vsyncadd [#allocation3], 0
      %s13 = sshll.u32 %s0, 4
      %s14 = int_to_ptr.hbm [resolvable:$true] %s13
      %s15 = sshll.u32 [#allocation2], 4
      %s16 = int_to_ptr.vmem [resolvable:$true] %s15
      %18 = dma.hbm_to_vmem [thread:$0]  %s14, 128, %s16, [#allocation3]
    $region5: #{_identity_pallas.1} parent=1 // pred_fallthru
      _
    // Predicated region
    $region6: #{_identity_pallas.1} parent=1 // pred_check
      _
    $region7: #{_identity_pallas.1} parent=1 // pred_check_branch
      %20 = sbr.rel (0) target = $region9
    $region8: #{_identity_pallas.1} parent=1 // pred_region
      %22 = dma.done [#allocation3], 128
    $region9: #{_identity_pallas.1} parent=1 // pred_fallthru
      _
    %v23 = vld [vmem:[#allocation2] sm:$0xff]
    %24 = vst [vmem:[#allocation5] sm:$0xff] %v23
    // Predicated region
    $region10: #{_identity_pallas.1} parent=1 // pred_check
      _
    $region11: #{_identity_pallas.1} parent=1 // pred_check_branch
      %26 = sbr.rel (0) target = $region13
    $region12: #{_identity_pallas.1} parent=1 // pred_region
      %28 = vsyncadd [#allocation4], 0
      %s30 = sshll.u32 [#allocation5], 4
      %s31 = int_to_ptr.vmem [resolvable:$true] %s30
      %s32 = sshll.u32 %s1, 4
      %s33 = int_to_ptr.hbm [resolvable:$true] %s32
      %35 = dma.vmem_to_hbm [thread:$0]  %s31, 128, %s33, [#allocation4]
    $region13: #{_identity_pallas.1} parent=1 // pred_fallthru
      _
    // Predicated region
    $region14: #{_identity_pallas.1} parent=1 // pred_check
      _
    $region15: #{_identity_pallas.1} parent=1 // pred_check_branch
      %37 = sbr.rel (0) target = $region17
    $region16: #{_identity_pallas.1} parent=1 // pred_region
      %39 = dma.done [#allocation4], 128
    $region17: #{_identity_pallas.1} parent=1 // pred_fallthru
      _
    %40 = vsyncpa [#allocation3], 1
    %41 = vsyncpa [#allocation4], 1

</llo_original>
